<compile_context>
chip_gen: v7x
topology: tpu7x:2x2x1
jax: 0.10.0
libtpu: 0.0.40
codegen_flags: <defaults>
</compile_context>

<pallas_src>
import jax
import jax.numpy as jnp
from jax.experimental import pallas as pl
from jax.experimental.pallas import tpu as pltpu


def _sigmoid(x):
    # sigmoid(x) = 0.5*(1 + tanh(x/2)): single EUP op, no divide.
    return 0.5 + 0.5 * jnp.tanh(0.5 * x)


def lstm_cell_kernel(x_ref, h_ref, c_ref, w_ref, b_ref,
                     h_out_ref, c_out_ref, xh_ref, gates_ref):
    """Fused LSTMCell for one batch tile. Gate order matches PyTorch: i, f, g, o."""
    H = h_out_ref.shape[-1]
    D_in = x_ref.shape[-1]

    # Stage the fused LHS [x | h] in VMEM so ONE MXU matmul covers both the
    # input->hidden and hidden->hidden contributions (K = D_in + H).
    xh_ref[:, :D_in] = x_ref[...]
    xh_ref[:, D_in:] = h_ref[...]

    # (TB, 4H) gate pre-activations, f32 accumulation, streamed to a VMEM
    # scratch so the full (TB, 4H) f32 value never lives in vregs at once.
    gates_ref[...] = (
        jnp.dot(xh_ref[...], w_ref[...], preferred_element_type=jnp.float32)
        + b_ref[...])

    # H = 128 -> lane-aligned 128-wide slices (cheap VMEM loads, no masking).
    i_g = _sigmoid(gates_ref[:, 0 * H:1 * H])
    f_g = _sigmoid(gates_ref[:, 1 * H:2 * H])
    g_g = jnp.tanh(gates_ref[:, 2 * H:3 * H])
    o_g = _sigmoid(gates_ref[:, 3 * H:4 * H])

    c_new = f_g * c_ref[...] + i_g * g_g            # cell-state math in f32
    h_new = o_g * jnp.tanh(c_new)

    c_out_ref[...] = c_new.astype(c_out_ref.dtype)
    h_out_ref[...] = h_new.astype(h_out_ref.dtype)


def _num_tensorcores():
    """Best-effort TensorCore count of the local device (>1 only on v7x-like parts)."""
    try:
        dev = jax.devices()[0]
        cores = getattr(dev, "num_cores", None)
        if isinstance(cores, int) and cores >= 2:
            return cores
        kind = (getattr(dev, "device_kind", "") or "").lower()
        if "v7" in kind:
            return 2
    except Exception:
        pass
    return 1


def policy_step_forward(prev_action, prev_state, w, b, *,
                        batch_tile=None, compute_dtype=jnp.bfloat16):
    """prev_action: [B, D_in]; prev_state = (h0, c0), each [B, H].

    `w` is the fused transposed weight [D_in + H, 4H] (vstack of torch's
    W_ih^T and W_hh^T); `b` is the folded bias (b_ih + b_hh).
    Returns (output, (output, new_cell)) like the torch module, all float32.
    """
    h0, c0 = prev_state
    B, D_in = prev_action.shape
    H = h0.shape[-1]
    assert w.shape == (D_in + H, 4 * H)
    assert b.shape == (4 * H,)

    if batch_tile is None:
        # Single grid step on single-TC parts (v5e/v6e): per-step overhead
        # (~0.35us) dominates a few-us kernel.  Only split the batch when the
        # device actually has >1 TensorCore (v7x) so "parallel" buys a core.
        n_cores = _num_tensorcores()
        batch_tile = B
        if n_cores > 1 and B % n_cores == 0 and (B // n_cores) % 16 == 0:
            batch_tile = B // n_cores
    assert B % batch_tile == 0, "batch must be divisible by batch_tile"

    # bf16 MXU inputs (f32 accumulate); cell state & bias stay f32.
    xc = prev_action.astype(compute_dtype)
    hc = h0.astype(compute_dtype)
    wc = w.astype(compute_dtype)
    b2d = b.reshape(1, 4 * H).astype(jnp.float32)
    c0f = c0.astype(jnp.float32)

    itemsize = jnp.dtype(compute_dtype).itemsize
    cost = pl.CostEstimate(
        flops=2 * B * 4 * H * (D_in + H) + 12 * B * H,
        transcendentals=5 * B * H,
        bytes_accessed=(xc.size + hc.size + wc.size) * itemsize
        + (c0f.size + b2d.size + 2 * B * H) * 4,
    )

    out_h, out_c = pl.pallas_call(
        lstm_cell_kernel,
        out_shape=(jax.ShapeDtypeStruct((B, H), jnp.float32),
                   jax.ShapeDtypeStruct((B, H), jnp.float32)),
        grid_spec=pltpu.PrefetchScalarGridSpec(
            num_scalar_prefetch=0,
            grid=(B // batch_tile,),
            in_specs=[
                pl.BlockSpec((batch_tile, D_in), lambda i: (i, 0)),     # x tile
                pl.BlockSpec((batch_tile, H), lambda i: (i, 0)),        # h tile
                pl.BlockSpec((batch_tile, H), lambda i: (i, 0)),        # c tile (f32)
                pl.BlockSpec((D_in + H, 4 * H), lambda i: (0, 0)),      # fused W (resident)
                pl.BlockSpec((1, 4 * H), lambda i: (0, 0)),             # folded bias
            ],
            out_specs=[
                pl.BlockSpec((batch_tile, H), lambda i: (i, 0)),        # h_new
                pl.BlockSpec((batch_tile, H), lambda i: (i, 0)),        # c_new
            ],
            scratch_shapes=[
                pltpu.VMEM((batch_tile, D_in + H), compute_dtype),      # [x | h] staging
                pltpu.VMEM((batch_tile, 4 * H), jnp.float32),           # gate accumulator
            ],
        ),
        compiler_params=pltpu.CompilerParams(
            dimension_semantics=("parallel",)),
        cost_estimate=cost,
        # In-place cell-state update: c0 (input 2) aliases c_new (output 1).
        input_output_aliases={2: 1},
    )(xc, hc, c0f, wc, b2d)

    # torch: output, new_state = lstm_cell(...); return (output, (output, new_state))
    return out_h, (out_h, out_c)


def init_lstm_cell_params(key, input_size, hidden_size):
    """torch.nn.LSTMCell-style init: U(-1/sqrt(H), 1/sqrt(H)), gate order i,f,g,o.

    Weights are stored transposed and fused: W = vstack([W_ih^T, W_hh^T]) of
    shape [input_size + hidden_size, 4*hidden_size] so the kernel computes
    [x | h] @ W with a single matmul; the two biases are folded into one.
    """
    k1, k2, k3, k4 = jax.random.split(key, 4)
    bound = 1.0 / jnp.sqrt(jnp.float32(hidden_size))
    w_ih = jax.random.uniform(k1, (input_size, 4 * hidden_size), jnp.float32,
                              minval=-bound, maxval=bound)
    w_hh = jax.random.uniform(k2, (hidden_size, 4 * hidden_size), jnp.float32,
                              minval=-bound, maxval=bound)
    b_ih = jax.random.uniform(k3, (4 * hidden_size,), jnp.float32,
                              minval=-bound, maxval=bound)
    b_hh = jax.random.uniform(k4, (4 * hidden_size,), jnp.float32,
                              minval=-bound, maxval=bound)
    return jnp.concatenate([w_ih, w_hh], axis=0), b_ih + b_hh


def lstm_cell_ref(x, h, c, w, b):
    """Pure-JAX f32 reference (same math as torch.nn.LSTMCell)."""
    hi = jax.lax.Precision.HIGHEST
    gates = jnp.dot(jnp.concatenate([x, h], axis=-1), w, precision=hi) + b
    H = h.shape[-1]
    i = jax.nn.sigmoid(gates[:, 0 * H:1 * H])
    f = jax.nn.sigmoid(gates[:, 1 * H:2 * H])
    g = jnp.tanh(gates[:, 2 * H:3 * H])
    o = jax.nn.sigmoid(gates[:, 3 * H:4 * H])
    c_new = f * c + i * g
    h_new = o * jnp.tanh(c_new)
    return h_new, c_new


if __name__ == "__main__":
    # Shapes implied by the module: LSTMCell(action_embed_size, state_embed_size).
    # Lane-dense (128) feature sizes; small batch (one or two 8x128-aligned tiles).
    action_embed_size = 128    # LSTMCell input_size
    state_embed_size = 128     # LSTMCell hidden_size
    batch = 128

    key = jax.random.PRNGKey(0)
    k_x, k_h, k_c, k_p = jax.random.split(key, 4)
    prev_action = jax.random.normal(k_x, (batch, action_embed_size), jnp.float32)
    h0 = jax.random.normal(k_h, (batch, state_embed_size), jnp.float32)
    c0 = jax.random.normal(k_c, (batch, state_embed_size), jnp.float32)
    w, b = init_lstm_cell_params(k_p, action_embed_size, state_embed_size)

    ref_h, ref_c = lstm_cell_ref(prev_action, h0, c0, w, b)

    # --- f32 compute path: tight check -------------------------------------
    out32, (h32, c32) = policy_step_forward(prev_action, (h0, c0), w, b,
                                            compute_dtype=jnp.float32)
    jax.block_until_ready((out32, c32))
    assert out32.shape == (batch, state_embed_size)
    assert c32.shape == (batch, state_embed_size)
    assert bool(jnp.all(out32 == h32))          # output IS the new hidden state
    assert jnp.allclose(out32, ref_h, atol=2e-4, rtol=1e-4)
    assert jnp.allclose(c32, ref_c, atol=2e-4, rtol=1e-4)

    # --- default bf16 MXU path: looser check (bf16 inputs, f32 accumulate) ---
    outbf, (hbf, cbf) = policy_step_forward(prev_action, (h0, c0), w, b)
    jax.block_until_ready((outbf, cbf))
    assert jnp.allclose(outbf, ref_h, atol=5e-2, rtol=0.0)
    assert jnp.allclose(cbf, ref_c, atol=1e-1, rtol=0.0)

    print("KERNEL_OK")
</pallas_src>

<mosaic_0001>
module attributes {stable_mosaic.version = 11 : i64} {
  func.func @lstm_cell_kernel(%arg0: i32, %arg1: memref<128x128xf32, #tpu.memory_space<vmem>>, %arg2: memref<128x128xf32, #tpu.memory_space<vmem>>, %arg3: memref<128x128xf32, #tpu.memory_space<vmem>>, %arg4: memref<256x512xf32, #tpu.memory_space<vmem>>, %arg5: memref<1x512xf32, #tpu.memory_space<vmem>>, %arg6: memref<128x128xf32, #tpu.memory_space<vmem>>, %arg7: memref<128x128xf32, #tpu.memory_space<vmem>>, %arg8: memref<128x256xf32, #tpu.memory_space<vmem>>, %arg9: memref<128x512xf32, #tpu.memory_space<vmem>>) attributes {dimension_semantics = [#tpu.dimension_semantics<parallel>], iteration_bounds = array<i64: 1>, scalar_prefetch = 0 : i64, scratch_operands = 2 : i64, tpu.core_type = #tpu.core_type<tc>, window_params = [{transform_indices = @transform_0, window_bounds = array<i64: 128, 128>}, {transform_indices = @transform_1, window_bounds = array<i64: 128, 128>}, {transform_indices = @transform_2, window_bounds = array<i64: 128, 128>}, {pipeline_mode = #tpu.pipeline_mode<synchronous>, transform_indices = @transform_3, window_bounds = array<i64: 256, 512>}, {pipeline_mode = #tpu.pipeline_mode<synchronous>, transform_indices = @transform_4, window_bounds = array<i64: 1, 512>}, {transform_indices = @transform_5, window_bounds = array<i64: 128, 128>}, {transform_indices = @transform_6, window_bounds = array<i64: 128, 128>}]} {
    %c0 = arith.constant 0 : index
    %c0_0 = arith.constant 0 : index
    %0 = vector.load %arg1[%c0, %c0_0] : memref<128x128xf32, #tpu.memory_space<vmem>>, vector<128x128xf32>
    %c0_1 = arith.constant 0 : index
    %c0_2 = arith.constant 0 : index
    %1 = vector.load %arg8[%c0_1, %c0_2] : memref<128x256xf32, #tpu.memory_space<vmem>>, vector<128x128xf32>
    tpu.vector_store %arg8[%c0_1, %c0_2], %0 {strides = array<i32>} : memref<128x256xf32, #tpu.memory_space<vmem>>, vector<128x128xf32>,
    %c0_3 = arith.constant 0 : index
    %c0_4 = arith.constant 0 : index
    %2 = vector.load %arg2[%c0_3, %c0_4] : memref<128x128xf32, #tpu.memory_space<vmem>>, vector<128x128xf32>
    %c0_5 = arith.constant 0 : index
    %c128 = arith.constant 128 : index
    %3 = vector.load %arg8[%c0_5, %c128] : memref<128x256xf32, #tpu.memory_space<vmem>>, vector<128x128xf32>
    tpu.vector_store %arg8[%c0_5, %c128], %2 {strides = array<i32>} : memref<128x256xf32, #tpu.memory_space<vmem>>, vector<128x128xf32>,
    %c0_6 = arith.constant 0 : index
    %c0_7 = arith.constant 0 : index
    %4 = vector.load %arg8[%c0_6, %c0_7] : memref<128x256xf32, #tpu.memory_space<vmem>>, vector<128x256xf32>
    %c0_8 = arith.constant 0 : index
    %c0_9 = arith.constant 0 : index
    %5 = vector.load %arg4[%c0_8, %c0_9] : memref<256x512xf32, #tpu.memory_space<vmem>>, vector<256x512xf32>
    %cst = arith.constant dense<0.000000e+00> : vector<128x512xf32>
    %6 = tpu.matmul %4, %5, %cst {dimension_numbers = #tpu.dot_dimension_numbers<[1], [0], [0], [1], [0, 0, 1, 1], [], []>} : vector<128x256xf32>, vector<256x512xf32>, vector<128x512xf32> -> vector<128x512xf32>
    %c0_10 = arith.constant 0 : index
    %c0_11 = arith.constant 0 : index
    %7 = vector.load %arg5[%c0_10, %c0_11] : memref<1x512xf32, #tpu.memory_space<vmem>>, vector<1x512xf32>
    %8 = vector.broadcast %7 : vector<1x512xf32> to vector<128x512xf32>
    %9 = arith.addf %6, %8 : vector<128x512xf32>
    %c0_12 = arith.constant 0 : index
    %c0_13 = arith.constant 0 : index
    %10 = vector.load %arg9[%c0_12, %c0_13] : memref<128x512xf32, #tpu.memory_space<vmem>>, vector<128x512xf32>
    tpu.vector_store %arg9[%c0_12, %c0_13], %9 {strides = array<i32>} : memref<128x512xf32, #tpu.memory_space<vmem>>, vector<128x512xf32>,
    %c0_14 = arith.constant 0 : index
    %c0_15 = arith.constant 0 : index
    %11 = vector.load %arg9[%c0_14, %c0_15] : memref<128x512xf32, #tpu.memory_space<vmem>>, vector<128x128xf32>
    %cst_16 = arith.constant 5.000000e-01 : f32
    %12 = vector.broadcast %cst_16 : f32 to vector<128x128xf32>
    %13 = arith.mulf %12, %11 : vector<128x128xf32>
    %14 = math.tanh %13 : vector<128x128xf32>
    %cst_17 = arith.constant 5.000000e-01 : f32
    %15 = vector.broadcast %cst_17 : f32 to vector<128x128xf32>
    %16 = arith.mulf %15, %14 : vector<128x128xf32>
    %cst_18 = arith.constant 5.000000e-01 : f32
    %17 = vector.broadcast %cst_18 : f32 to vector<128x128xf32>
    %18 = arith.addf %17, %16 : vector<128x128xf32>
    %c0_19 = arith.constant 0 : index
    %c128_20 = arith.constant 128 : index
    %19 = vector.load %arg9[%c0_19, %c128_20] : memref<128x512xf32, #tpu.memory_space<vmem>>, vector<128x128xf32>
    %cst_21 = arith.constant 5.000000e-01 : f32
    %20 = vector.broadcast %cst_21 : f32 to vector<128x128xf32>
    %21 = arith.mulf %20, %19 : vector<128x128xf32>
    %22 = math.tanh %21 : vector<128x128xf32>
    %cst_22 = arith.constant 5.000000e-01 : f32
    %23 = vector.broadcast %cst_22 : f32 to vector<128x128xf32>
    %24 = arith.mulf %23, %22 : vector<128x128xf32>
    %cst_23 = arith.constant 5.000000e-01 : f32
    %25 = vector.broadcast %cst_23 : f32 to vector<128x128xf32>
    %26 = arith.addf %25, %24 : vector<128x128xf32>
    %c0_24 = arith.constant 0 : index
    %c256 = arith.constant 256 : index
    %27 = vector.load %arg9[%c0_24, %c256] : memref<128x512xf32, #tpu.memory_space<vmem>>, vector<128x128xf32>
    %28 = math.tanh %27 : vector<128x128xf32>
    %c0_25 = arith.constant 0 : index
    %c384 = arith.constant 384 : index
    %29 = vector.load %arg9[%c0_25, %c384] : memref<128x512xf32, #tpu.memory_space<vmem>>, vector<128x128xf32>
    %cst_26 = arith.constant 5.000000e-01 : f32
    %30 = vector.broadcast %cst_26 : f32 to vector<128x128xf32>
    %31 = arith.mulf %30, %29 : vector<128x128xf32>
    %32 = math.tanh %31 : vector<128x128xf32>
    %cst_27 = arith.constant 5.000000e-01 : f32
    %33 = vector.broadcast %cst_27 : f32 to vector<128x128xf32>
    %34 = arith.mulf %33, %32 : vector<128x128xf32>
    %cst_28 = arith.constant 5.000000e-01 : f32
    %35 = vector.broadcast %cst_28 : f32 to vector<128x128xf32>
    %36 = arith.addf %35, %34 : vector<128x128xf32>
    %c0_29 = arith.constant 0 : index
    %c0_30 = arith.constant 0 : index
    %37 = vector.load %arg3[%c0_29, %c0_30] : memref<128x128xf32, #tpu.memory_space<vmem>>, vector<128x128xf32>
    %38 = arith.mulf %26, %37 : vector<128x128xf32>
    %39 = arith.mulf %18, %28 : vector<128x128xf32>
    %40 = arith.addf %38, %39 : vector<128x128xf32>
    %41 = math.tanh %40 : vector<128x128xf32>
    %42 = arith.mulf %36, %41 : vector<128x128xf32>
    %c0_31 = arith.constant 0 : index
    %c0_32 = arith.constant 0 : index
    %43 = vector.load %arg7[%c0_31, %c0_32] : memref<128x128xf32, #tpu.memory_space<vmem>>, vector<128x128xf32>
    tpu.vector_store %arg7[%c0_31, %c0_32], %40 {strides = array<i32>} : memref<128x128xf32, #tpu.memory_space<vmem>>, vector<128x128xf32>,
    %c0_33 = arith.constant 0 : index
    %c0_34 = arith.constant 0 : index
    %44 = vector.load %arg6[%c0_33, %c0_34] : memref<128x128xf32, #tpu.memory_space<vmem>>, vector<128x128xf32>
    tpu.vector_store %arg6[%c0_33, %c0_34], %42 {strides = array<i32>} : memref<128x128xf32, #tpu.memory_space<vmem>>, vector<128x128xf32>,
    return
  }
  func.func @transform_0(%arg0: i32) -> (i32, i32) {
    %c0_i32 = arith.constant 0 : i32
    %c0_i32_0 = arith.constant 0 : i32
    return %arg0, %c0_i32 : i32, i32
  }
  func.func @transform_1(%arg0: i32) -> (i32, i32) {
    %c0_i32 = arith.constant 0 : i32
    %c0_i32_0 = arith.constant 0 : i32
    return %arg0, %c0_i32 : i32, i32
  }
  func.func @transform_2(%arg0: i32) -> (i32, i32) {
    %c0_i32 = arith.constant 0 : i32
    %c0_i32_0 = arith.constant 0 : i32
    return %arg0, %c0_i32 : i32, i32
  }
  func.func @transform_3(%arg0: i32) -> (i32, i32) {
    %c0_i32 = arith.constant 0 : i32
    %c0_i32_0 = arith.constant 0 : i32
    %c0_i32_1 = arith.constant 0 : i32
    return %c0_i32, %c0_i32_0 : i32, i32
  }
  func.func @transform_4(%arg0: i32) -> (i32, i32) {
    %c0_i32 = arith.constant 0 : i32
    %c0_i32_0 = arith.constant 0 : i32
    %c0_i32_1 = arith.constant 0 : i32
    return %c0_i32, %c0_i32_0 : i32, i32
  }
  func.func @transform_5(%arg0: i32) -> (i32, i32) {
    %c0_i32 = arith.constant 0 : i32
    %c0_i32_0 = arith.constant 0 : i32
    return %arg0, %c0_i32 : i32, i32
  }
  func.func @transform_6(%arg0: i32) -> (i32, i32) {
    %c0_i32 = arith.constant 0 : i32
    %c0_i32_0 = arith.constant 0 : i32
    return %arg0, %c0_i32 : i32, i32
  }
}

</mosaic_0001>

<llo_original>
// kernel: tpu_custom_call.1
$region0: #{tpu_custom_call.1}
  #allocation0 [shape = 'u32[]', space=smem, size = 0x4, offset = 0x4, fixed_abs, tag = 'smem constant byte address 0x4 - core index']
  #allocation1 [shape = 'u32[144,128]{1,0:T(1,128)}', space=vmem, size = 0x12000, scoped, tag = 'internal scratch']
  #allocation2 [shape = 'f32[128,256]{1,0:T(8,128)}', space=vmem, size = 0x20000, scoped, tag = 'scratch operand']
  #allocation3 [shape = 'f32[128,512]{1,0:T(8,128)}', space=vmem, size = 0x40000, scoped, tag = 'scratch operand']
  %s0 = inlined_call_operand.vmem [shape: f32[128,128], index: 0, kind: input, shape index: {}]
  %s1 = inlined_call_operand.vmem [shape: f32[128,128], index: 1, kind: input, shape index: {}]
  %s2 = inlined_call_operand.hbm [shape: f32[128,128], index: 2, kind: input, shape index: {}, may-alias: {2,6}]
  %s3 = inlined_call_operand.hbm [shape: f32[256,512], index: 3, kind: input, shape index: {}]
  %s4 = inlined_call_operand.hbm [shape: f32[1,512], index: 4, kind: input, shape index: {}]
  %s5 = inlined_call_operand.hbm [shape: f32[128,128], index: 5, kind: output, shape index: {0}]
  %s6 = inlined_call_operand.hbm [shape: f32[128,128], index: 6, kind: output, shape index: {1}, may-alias: {2,6}]
  %7 = xla_tuple %s5, %s6
  %s8 = sld [smem:[#allocation0]]
  $region50: #{tpu_custom_call.1} parent=0
    _
  %s10 = ssub.s32 1, %s8
  %s11 = scalar_select 0, %s10, %s8
  $region1: #{tpu_custom_call.1} parent=0
    #allocation4 [shape = 'u8[65536]{0}', space=vmem, size = 0x10000, scoped, tag = 'input window, operand 2, single buffered']
    #allocation5 [shape = 's32[1]{0}', space=sflag, size = 0x4, scoped, tag = 'scoped memory for tpu_custom_call.1']
    #allocation6 [shape = 's32[1]{0}', space=sflag, size = 0x4, scoped, tag = 'scoped memory for tpu_custom_call.1']
    #allocation7 [shape = 'u8[524288]{0}', space=vmem, size = 0x80000, scoped, tag = 'input window, operand 3, single buffered']
    #allocation8 [shape = 's32[1]{0}', space=sflag, size = 0x4, scoped, tag = 'scoped memory for tpu_custom_call.1']
    #allocation9 [shape = 'u8[2048]{0}', space=vmem, size = 0x800, scoped, tag = 'input window, operand 4, single buffered']
    #allocation10 [shape = 'u8[65536]{0}', space=vmem, size = 0x10000, scoped, tag = 'output window, operand 0, single buffered']
    #allocation11 [shape = 'u8[65536]{0}', space=vmem, size = 0x10000, scoped, tag = 'output window, operand 1, single buffered']
    #allocation12 [shape = 's32[1]{0}', space=sflag, size = 0x4, scoped, tag = 'scoped memory for tpu_custom_call.1']
    %12 = vsyncpa [#allocation5], 0
    %13 = vsyncpa [#allocation8], 0
    %14 = vsyncpa [#allocation6], 0
    %15 = vsyncpa [#allocation12], 0
    // Predicated region
    $region2: #{tpu_custom_call.1} parent=1 // pred_check
      _
    $region3: #{tpu_custom_call.1} parent=1 // pred_check_branch
      %17 = sbr.rel (0) target = $region5
    $region4: #{tpu_custom_call.1} parent=1 // pred_region
      _
    $region5: #{tpu_custom_call.1} parent=1 // pred_fallthru
      _
    // Predicated region
    $region6: #{tpu_custom_call.1} parent=1 // pred_check
      _
    $region7: #{tpu_custom_call.1} parent=1 // pred_check_branch
      %19 = sbr.rel (0) target = $region9
    $region8: #{tpu_custom_call.1} parent=1 // pred_region
      _
    $region9: #{tpu_custom_call.1} parent=1 // pred_fallthru
      _
    // Predicated region
    $region10: #{tpu_custom_call.1} parent=1 // pred_check
      _
    $region11: #{tpu_custom_call.1} parent=1 // pred_check_branch
      %21 = sbr.rel (0) target = $region13
    $region12: #{tpu_custom_call.1} parent=1 // pred_region
      %s23 = ssub.s32 2048, 2048
      %24 = vsyncadd [#allocation5], %s23
      %s25 = sshll.u32 [#allocation4], 4
      %s26 = int_to_ptr.vmem [resolvable:$true] %s25
      %31 = dma.hbm_to_vmem [thread:$0]  %s2, 2048, %s26, [#allocation5], 128, 128, 8
    $region13: #{tpu_custom_call.1} parent=1 // pred_fallthru
      _
    // Predicated region
    $region14: #{tpu_custom_call.1} parent=1 // pred_check
      _
    $region15: #{tpu_custom_call.1} parent=1 // pred_check_branch
      %33 = sbr.rel (0) target = $region17
    $region16: #{tpu_custom_call.1} parent=1 // pred_region
      %s35 = ssub.s32 16384, 16384
      %36 = vsyncadd [#allocation8], %s35
      %s37 = sshll.u32 [#allocation7], 4
      %s38 = int_to_ptr.vmem [resolvable:$true] %s37
      %43 = dma.hbm_to_vmem [thread:$0]  %s3, 16384, %s38, [#allocation8], 512, 512, 32
    $region17: #{tpu_custom_call.1} parent=1 // pred_fallthru
      _
    // Predicated region
    $region18: #{tpu_custom_call.1} parent=1 // pred_check
      _
    $region19: #{tpu_custom_call.1} parent=1 // pred_check_branch
      %45 = sbr.rel (0) target = $region21
    $region20: #{tpu_custom_call.1} parent=1 // pred_region
      %s47 = ssub.s32 64, 64
      %48 = vsyncadd [#allocation8], %s47
      %s50 = sshll.u32 [#allocation9], 4
      %s51 = int_to_ptr.vmem [resolvable:$true] %s50
      %53 = dma.hbm_to_vmem [thread:$0]  %s4, 64, %s51, [#allocation8]
    $region21: #{tpu_custom_call.1} parent=1 // pred_fallthru
      _
    // Predicated region
    $region22: #{tpu_custom_call.1} parent=1 // pred_check
      _
    $region23: #{tpu_custom_call.1} parent=1 // pred_check_branch
      %55 = sbr.rel (0) target = $region25
    $region24: #{tpu_custom_call.1} parent=1 // pred_region
      %56 = dma.done [#allocation5], 2048
    $region25: #{tpu_custom_call.1} parent=1 // pred_fallthru
      _
    // Predicated region
    $region26: #{tpu_custom_call.1} parent=1 // pred_check
      _
    $region27: #{tpu_custom_call.1} parent=1 // pred_check_branch
      %58 = sbr.rel (0) target = $region29
    $region28: #{tpu_custom_call.1} parent=1 // pred_region
      %59 = dma.done [#allocation8], 16384
    $region29: #{tpu_custom_call.1} parent=1 // pred_fallthru
      _
    // Predicated region
    $region30: #{tpu_custom_call.1} parent=1 // pred_check
      _
    $region31: #{tpu_custom_call.1} parent=1 // pred_check_branch
      %61 = sbr.rel (0) target = $region33
    $region32: #{tpu_custom_call.1} parent=1 // pred_region
      %62 = dma.done [#allocation8], 64
    $region33: #{tpu_custom_call.1} parent=1 // pred_fallthru
      _
    %v63 = vld [vmem:[%s0] sm:$0xff]
    %v64 = vld [vmem:[%s0 + $0x8] sm:$0xff]
    %v65 = vld [vmem:[%s0 + $0x10] sm:$0xff]
    %v66 = vld [vmem:[%s0 + $0x18] sm:$0xff]
    %v67 = vld [vmem:[%s0 + $0x20] sm:$0xff]
    %v68 = vld [vmem:[%s0 + $0x28] sm:$0xff]
    %v69 = vld [vmem:[%s0 + $0x30] sm:$0xff]
    %v70 = vld [vmem:[%s0 + $0x38] sm:$0xff]
    %v71 = vld [vmem:[%s0 + $0x40] sm:$0xff]
    %v72 = vld [vmem:[%s0 + $0x48] sm:$0xff]
    %v73 = vld [vmem:[%s0 + $0x50] sm:$0xff]
    %v74 = vld [vmem:[%s0 + $0x58] sm:$0xff]
    %v75 = vld [vmem:[%s0 + $0x60] sm:$0xff]
    %v76 = vld [vmem:[%s0 + $0x68] sm:$0xff]
    %v77 = vld [vmem:[%s0 + $0x70] sm:$0xff]
    %v78 = vld [vmem:[%s0 + $0x78] sm:$0xff]
    %79 = vst [vmem:[#allocation2] sm:$0xff] %v63
    %80 = vst [vmem:[#allocation2 + $0x10] sm:$0xff] %v64
    %81 = vst [vmem:[#allocation2 + $0x20] sm:$0xff] %v65
    %82 = vst [vmem:[#allocation2 + $0x30] sm:$0xff] %v66
    %83 = vst [vmem:[#allocation2 + $0x40] sm:$0xff] %v67
    %84 = vst [vmem:[#allocation2 + $0x50] sm:$0xff] %v68
    %85 = vst [vmem:[#allocation2 + $0x60] sm:$0xff] %v69
    %86 = vst [vmem:[#allocation2 + $0x70] sm:$0xff] %v70
    %87 = vst [vmem:[#allocation2 + $0x80] sm:$0xff] %v71
    %88 = vst [vmem:[#allocation2 + $0x90] sm:$0xff] %v72
    %89 = vst [vmem:[#allocation2 + $0xa0] sm:$0xff] %v73
    %90 = vst [vmem:[#allocation2 + $0xb0] sm:$0xff] %v74
    %91 = vst [vmem:[#allocation2 + $0xc0] sm:$0xff] %v75
    %92 = vst [vmem:[#allocation2 + $0xd0] sm:$0xff] %v76
    %93 = vst [vmem:[#allocation2 + $0xe0] sm:$0xff] %v77
    %94 = vst [vmem:[#allocation2 + $0xf0] sm:$0xff] %v78
    %v95 = vld [vmem:[%s1] sm:$0xff]
    %v96 = vld [vmem:[%s1 + $0x8] sm:$0xff]
    %v97 = vld [vmem:[%s1 + $0x10] sm:$0xff]
    %v98 = vld [vmem:[%s1 + $0x18] sm:$0xff]
    %v99 = vld [vmem:[%s1 + $0x20] sm:$0xff]
    %v100 = vld [vmem:[%s1 + $0x28] sm:$0xff]
    %v101 = vld [vmem:[%s1 + $0x30] sm:$0xff]
    %v102 = vld [vmem:[%s1 + $0x38] sm:$0xff]
    %v103 = vld [vmem:[%s1 + $0x40] sm:$0xff]
    %v104 = vld [vmem:[%s1 + $0x48] sm:$0xff]
    %v105 = vld [vmem:[%s1 + $0x50] sm:$0xff]
    %v106 = vld [vmem:[%s1 + $0x58] sm:$0xff]
    %v107 = vld [vmem:[%s1 + $0x60] sm:$0xff]
    %v108 = vld [vmem:[%s1 + $0x68] sm:$0xff]
    %v109 = vld [vmem:[%s1 + $0x70] sm:$0xff]
    %v110 = vld [vmem:[%s1 + $0x78] sm:$0xff]
    %111 = vst [vmem:[#allocation2 + $0x8] sm:$0xff] %v95
    %112 = vst [vmem:[#allocation2 + $0x18] sm:$0xff] %v96
    %113 = vst [vmem:[#allocation2 + $0x28] sm:$0xff] %v97
    %114 = vst [vmem:[#allocation2 + $0x38] sm:$0xff] %v98
    %115 = vst [vmem:[#allocation2 + $0x48] sm:$0xff] %v99
    %116 = vst [vmem:[#allocation2 + $0x58] sm:$0xff] %v100
    %117 = vst [vmem:[#allocation2 + $0x68] sm:$0xff] %v101
    %118 = vst [vmem:[#allocation2 + $0x78] sm:$0xff] %v102
    %119 = vst [vmem:[#allocation2 + $0x88] sm:$0xff] %v103
    %120 = vst [vmem:[#allocation2 + $0x98] sm:$0xff] %v104
    %121 = vst [vmem:[#allocation2 + $0xa8] sm:$0xff] %v105
    %122 = vst [vmem:[#allocation2 + $0xb8] sm:$0xff] %v106
    %123 = vst [vmem:[#allocation2 + $0xc8] sm:$0xff] %v107
    %124 = vst [vmem:[#allocation2 + $0xd8] sm:$0xff] %v108
    %125 = vst [vmem:[#allocation2 + $0xe8] sm:$0xff] %v109
    %126 = vst [vmem:[#allocation2 + $0xf8] sm:$0xff] %v110
    %v127 = vld [vmem:[#allocation2] sm:$0xff]
    %v128 = vld [vmem:[#allocation2 + $0x8] sm:$0xff]
    %v129 = vld [vmem:[#allocation2 + $0x10] sm:$0xff]
    %v130 = vld [vmem:[#allocation2 + $0x18] sm:$0xff]
    %v131 = vld [vmem:[#allocation2 + $0x20] sm:$0xff]
    %v132 = vld [vmem:[#allocation2 + $0x28] sm:$0xff]
    %v133 = vld [vmem:[#allocation2 + $0x30] sm:$0xff]
    %v134 = vld [vmem:[#allocation2 + $0x38] sm:$0xff]
    %v135 = vld [vmem:[#allocation2 + $0x40] sm:$0xff]
    %v136 = vld [vmem:[#allocation2 + $0x48] sm:$0xff]
    %v137 = vld [vmem:[#allocation2 + $0x50] sm:$0xff]
    %v138 = vld [vmem:[#allocation2 + $0x58] sm:$0xff]
    %v139 = vld [vmem:[#allocation2 + $0x60] sm:$0xff]
    %v140 = vld [vmem:[#allocation2 + $0x68] sm:$0xff]
    %v141 = vld [vmem:[#allocation2 + $0x70] sm:$0xff]
    %v142 = vld [vmem:[#allocation2 + $0x78] sm:$0xff]
    %v143 = vld [vmem:[#allocation2 + $0x80] sm:$0xff]
    %v144 = vld [vmem:[#allocation2 + $0x88] sm:$0xff]
    %v145 = vld [vmem:[#allocation2 + $0x90] sm:$0xff]
    %v146 = vld [vmem:[#allocation2 + $0x98] sm:$0xff]
    %v147 = vld [vmem:[#allocation2 + $0xa0] sm:$0xff]
    %v148 = vld [vmem:[#allocation2 + $0xa8] sm:$0xff]
    %v149 = vld [vmem:[#allocation2 + $0xb0] sm:$0xff]
    %v150 = vld [vmem:[#allocation2 + $0xb8] sm:$0xff]
    %v151 = vld [vmem:[#allocation2 + $0xc0] sm:$0xff]
    %v152 = vld [vmem:[#allocation2 + $0xc8] sm:$0xff]
    %v153 = vld [vmem:[#allocation2 + $0xd0] sm:$0xff]
    %v154 = vld [vmem:[#allocation2 + $0xd8] sm:$0xff]
    %v155 = vld [vmem:[#allocation2 + $0xe0] sm:$0xff]
    %v156 = vld [vmem:[#allocation2 + $0xe8] sm:$0xff]
    %v157 = vld [vmem:[#allocation2 + $0xf0] sm:$0xff]
    %v158 = vld [vmem:[#allocation2 + $0xf8] sm:$0xff]
    %v159 = vld [vmem:[#allocation7] sm:$0xff]
    %v160 = vld [vmem:[#allocation7 + $0x8] sm:$0xff]
    %v161 = vld [vmem:[#allocation7 + $0x10] sm:$0xff]
    %v162 = vld [vmem:[#allocation7 + $0x18] sm:$0xff]
    %v163 = vld [vmem:[#allocation7 + $0x20] sm:$0xff]
    %v164 = vld [vmem:[#allocation7 + $0x28] sm:$0xff]
    %v165 = vld [vmem:[#allocation7 + $0x30] sm:$0xff]
    %v166 = vld [vmem:[#allocation7 + $0x38] sm:$0xff]
    %v167 = vld [vmem:[#allocation7 + $0x40] sm:$0xff]
    %v168 = vld [vmem:[#allocation7 + $0x48] sm:$0xff]
    %v169 = vld [vmem:[#allocation7 + $0x50] sm:$0xff]
    %v170 = vld [vmem:[#allocation7 + $0x58] sm:$0xff]
    %v171 = vld [vmem:[#allocation7 + $0x60] sm:$0xff]
    %v172 = vld [vmem:[#allocation7 + $0x68] sm:$0xff]
    %v173 = vld [vmem:[#allocation7 + $0x70] sm:$0xff]
    %v174 = vld [vmem:[#allocation7 + $0x78] sm:$0xff]
    %v175 = vld [vmem:[#allocation7 + $0x80] sm:$0xff]
    %v176 = vld [vmem:[#allocation7 + $0x88] sm:$0xff]
    %v177 = vld [vmem:[#allocation7 + $0x90] sm:$0xff]
    %v178 = vld [vmem:[#allocation7 + $0x98] sm:$0xff]
    %v179 = vld [vmem:[#allocation7 + $0xa0] sm:$0xff]
    %v180 = vld [vmem:[#allocation7 + $0xa8] sm:$0xff]
    %v181 = vld [vmem:[#allocation7 + $0xb0] sm:$0xff]
    %v182 = vld [vmem:[#allocation7 + $0xb8] sm:$0xff]
    %v183 = vld [vmem:[#allocation7 + $0xc0] sm:$0xff]
    %v184 = vld [vmem:[#allocation7 + $0xc8] sm:$0xff]
    %v185 = vld [vmem:[#allocation7 + $0xd0] sm:$0xff]
    %v186 = vld [vmem:[#allocation7 + $0xd8] sm:$0xff]
    %v187 = vld [vmem:[#allocation7 + $0xe0] sm:$0xff]
    %v188 = vld [vmem:[#allocation7 + $0xe8] sm:$0xff]
    %v189 = vld [vmem:[#allocation7 + $0xf0] sm:$0xff]
    %v190 = vld [vmem:[#allocation7 + $0xf8] sm:$0xff]
    %v191 = vld [vmem:[#allocation7 + $0x100] sm:$0xff]
    %v192 = vld [vmem:[#allocation7 + $0x108] sm:$0xff]
    %v193 = vld [vmem:[#allocation7 + $0x110] sm:$0xff]
    %v194 = vld [vmem:[#allocation7 + $0x118] sm:$0xff]
    %v195 = vld [vmem:[#allocation7 + $0x120] sm:$0xff]
    %v196 = vld [vmem:[#allocation7 + $0x128] sm:$0xff]
    %v197 = vld [vmem:[#allocation7 + $0x130] sm:$0xff]
    %v198 = vld [vmem:[#allocation7 + $0x138] sm:$0xff]
    %v199 = vld [vmem:[#allocation7 + $0x140] sm:$0xff]
    %v200 = vld [vmem:[#allocation7 + $0x148] sm:$0xff]
    %v201 = vld [vmem:[#allocation7 + $0x150] sm:$0xff]
    %v202 = vld [vmem:[#allocation7 + $0x158] sm:$0xff]
    %v203 = vld [vmem:[#allocation7 + $0x160] sm:$0xff]
    %v204 = vld [vmem:[#allocation7 + $0x168] sm:$0xff]
    %v205 = vld [vmem:[#allocation7 + $0x170] sm:$0xff]
    %v206 = vld [vmem:[#allocation7 + $0x178] sm:$0xff]
    %v207 = vld [vmem:[#allocation7 + $0x180] sm:$0xff]
    %v208 = vld [vmem:[#allocation7 + $0x188] sm:$0xff]
    %v209 = vld [vmem:[#allocation7 + $0x190] sm:$0xff]
    %v210 = vld [vmem:[#allocation7 + $0x198] sm:$0xff]
    %v211 = vld [vmem:[#allocation7 + $0x1a0] sm:$0xff]
    %v212 = vld [vmem:[#allocation7 + $0x1a8] sm:$0xff]
    %v213 = vld [vmem:[#allocation7 + $0x1b0] sm:$0xff]
    %v214 = vld [vmem:[#allocation7 + $0x1b8] sm:$0xff]
    %v215 = vld [vmem:[#allocation7 + $0x1c0] sm:$0xff]
    %v216 = vld [vmem:[#allocation7 + $0x1c8] sm:$0xff]
    %v217 = vld [vmem:[#allocation7 + $0x1d0] sm:$0xff]
    %v218 = vld [vmem:[#allocation7 + $0x1d8] sm:$0xff]
    %v219 = vld [vmem:[#allocation7 + $0x1e0] sm:$0xff]
    %v220 = vld [vmem:[#allocation7 + $0x1e8] sm:$0xff]
    %v221 = vld [vmem:[#allocation7 + $0x1f0] sm:$0xff]
    %v222 = vld [vmem:[#allocation7 + $0x1f8] sm:$0xff]
    %v223 = vld [vmem:[#allocation7 + $0x200] sm:$0xff]
    %v224 = vld [vmem:[#allocation7 + $0x208] sm:$0xff]
    %v225 = vld [vmem:[#allocation7 + $0x210] sm:$0xff]
    %v226 = vld [vmem:[#allocation7 + $0x218] sm:$0xff]
    %v227 = vld [vmem:[#allocation7 + $0x220] sm:$0xff]
    %v228 = vld [vmem:[#allocation7 + $0x228] sm:$0xff]
    %v229 = vld [vmem:[#allocation7 + $0x230] sm:$0xff]
    %v230 = vld [vmem:[#allocation7 + $0x238] sm:$0xff]
    %v231 = vld [vmem:[#allocation7 + $0x240] sm:$0xff]
    %v232 = vld [vmem:[#allocation7 + $0x248] sm:$0xff]
    %v233 = vld [vmem:[#allocation7 + $0x250] sm:$0xff]
    %v234 = vld [vmem:[#allocation7 + $0x258] sm:$0xff]
    %v235 = vld [vmem:[#allocation7 + $0x260] sm:$0xff]
    %v236 = vld [vmem:[#allocation7 + $0x268] sm:$0xff]
    %v237 = vld [vmem:[#allocation7 + $0x270] sm:$0xff]
    %v238 = vld [vmem:[#allocation7 + $0x278] sm:$0xff]
    %v239 = vld [vmem:[#allocation7 + $0x280] sm:$0xff]
    %v240 = vld [vmem:[#allocation7 + $0x288] sm:$0xff]
    %v241 = vld [vmem:[#allocation7 + $0x290] sm:$0xff]
    %v242 = vld [vmem:[#allocation7 + $0x298] sm:$0xff]
    %v243 = vld [vmem:[#allocation7 + $0x2a0] sm:$0xff]
    %v244 = vld [vmem:[#allocation7 + $0x2a8] sm:$0xff]
    %v245 = vld [vmem:[#allocation7 + $0x2b0] sm:$0xff]
    %v246 = vld [vmem:[#allocation7 + $0x2b8] sm:$0xff]
    %v247 = vld [vmem:[#allocation7 + $0x2c0] sm:$0xff]
    %v248 = vld [vmem:[#allocation7 + $0x2c8] sm:$0xff]
    %v249 = vld [vmem:[#allocation7 + $0x2d0] sm:$0xff]
    %v250 = vld [vmem:[#allocation7 + $0x2d8] sm:$0xff]
    %v251 = vld [vmem:[#allocation7 + $0x2e0] sm:$0xff]
    %v252 = vld [vmem:[#allocation7 + $0x2e8] sm:$0xff]
    %v253 = vld [vmem:[#allocation7 + $0x2f0] sm:$0xff]
    %v254 = vld [vmem:[#allocation7 + $0x2f8] sm:$0xff]
    %v255 = vld [vmem:[#allocation7 + $0x300] sm:$0xff]
    %v256 = vld [vmem:[#allocation7 + $0x308] sm:$0xff]
    %v257 = vld [vmem:[#allocation7 + $0x310] sm:$0xff]
    %v258 = vld [vmem:[#allocation7 + $0x318] sm:$0xff]
    %v259 = vld [vmem:[#allocation7 + $0x320] sm:$0xff]
    %v260 = vld [vmem:[#allocation7 + $0x328] sm:$0xff]
    %v261 = vld [vmem:[#allocation7 + $0x330] sm:$0xff]
    %v262 = vld [vmem:[#allocation7 + $0x338] sm:$0xff]
    %v263 = vld [vmem:[#allocation7 + $0x340] sm:$0xff]
    %v264 = vld [vmem:[#allocation7 + $0x348] sm:$0xff]
    %v265 = vld [vmem:[#allocation7 + $0x350] sm:$0xff]
    %v266 = vld [vmem:[#allocation7 + $0x358] sm:$0xff]
    %v267 = vld [vmem:[#allocation7 + $0x360] sm:$0xff]
    %v268 = vld [vmem:[#allocation7 + $0x368] sm:$0xff]
    %v269 = vld [vmem:[#allocation7 + $0x370] sm:$0xff]
    %v270 = vld [vmem:[#allocation7 + $0x378] sm:$0xff]
    %v271 = vld [vmem:[#allocation7 + $0x380] sm:$0xff]
    %v272 = vld [vmem:[#allocation7 + $0x388] sm:$0xff]
    %v273 = vld [vmem:[#allocation7 + $0x390] sm:$0xff]
    %v274 = vld [vmem:[#allocation7 + $0x398] sm:$0xff]
    %v275 = vld [vmem:[#allocation7 + $0x3a0] sm:$0xff]
    %v276 = vld [vmem:[#allocation7 + $0x3a8] sm:$0xff]
    %v277 = vld [vmem:[#allocation7 + $0x3b0] sm:$0xff]
    %v278 = vld [vmem:[#allocation7 + $0x3b8] sm:$0xff]
    %v279 = vld [vmem:[#allocation7 + $0x3c0] sm:$0xff]
    %v280 = vld [vmem:[#allocation7 + $0x3c8] sm:$0xff]
    %v281 = vld [vmem:[#allocation7 + $0x3d0] sm:$0xff]
    %v282 = vld [vmem:[#allocation7 + $0x3d8] sm:$0xff]
    %v283 = vld [vmem:[#allocation7 + $0x3e0] sm:$0xff]
    %v284 = vld [vmem:[#allocation7 + $0x3e8] sm:$0xff]
    %v285 = vld [vmem:[#allocation7 + $0x3f0] sm:$0xff]
    %v286 = vld [vmem:[#allocation7 + $0x3f8] sm:$0xff]
    %v287 = vld [vmem:[#allocation9] sm:$0xf]
    %v289 = vlaneseq
    %v290 = vshrl.u32 %v289, 7
    %v291 = vsub.s32 0, %v290
    %v292 = vrot.slane %v287, %v291
    %v293 = vlaneseq
    %v294 = vshrl.u32 %v293, 7
    %v295 = vsub.s32 1, %v294
    %v296 = vrot.slane %v287, %v295
    %v297 = vlaneseq
    %v298 = vshrl.u32 %v297, 7
    %v299 = vsub.s32 2, %v298
    %v300 = vrot.slane %v287, %v299
    %v301 = vlaneseq
    %v302 = vshrl.u32 %v301, 7
    %v303 = vsub.s32 3, %v302
    %v304 = vrot.slane %v287, %v303
    %309 = vmatprep.subr.mxu0 %v160
    %310 = vmatpush1.msra.mxu0 %v159
    %311 = vmatprep.subr.mxu0 %v164
    %312 = vmatpush1.msra.mxu0 %v163
    %313 = vmatprep.subr.mxu0 %v168
    %314 = vmatpush1.msra.mxu0 %v167
    %315 = vmatprep.subr.mxu0 %v172
    %316 = vmatpush1.msra.mxu0 %v171
    %317 = vmatprep.subr.mxu0 %v176
    %318 = vmatpush1.msra.mxu0 %v175
    %319 = vmatprep.subr.mxu0 %v180
    %320 = vmatpush1.msra.mxu0 %v179
    %321 = vmatprep.subr.mxu0 %v184
    %322 = vmatpush1.msra.mxu0 %v183
    %323 = vmatprep.subr.mxu0 %v188
    %324 = vmatpush1.msra.mxu0 %v187
    %325 = vmatprep.subr.mxu0 %v192
    %326 = vmatpush1.msra.mxu0 %v191
    %327 = vmatprep.subr.mxu0 %v196
    %328 = vmatpush1.msra.mxu0 %v195
    %329 = vmatprep.subr.mxu0 %v200
    %330 = vmatpush1.msra.mxu0 %v199
    %331 = vmatprep.subr.mxu0 %v204
    %332 = vmatpush1.msra.mxu0 %v203
    %333 = vmatprep.subr.mxu0 %v208
    %334 = vmatpush1.msra.mxu0 %v207
    %335 = vmatprep.subr.mxu0 %v212
    %336 = vmatpush1.msra.mxu0 %v211
    %337 = vmatprep.subr.mxu0 %v216
    %338 = vmatpush1.msra.mxu0 %v215
    %339 = vmatprep.subr.mxu0 %v220
    %340 = vmatpush1.msra.mxu0 %v219
    %341 = vmatprep.subr.mxu0 %v224
    %342 = vmatpush1.msra.mxu0 %v223
    %343 = vmatprep.subr.mxu0 %v228
    %344 = vmatpush1.msra.mxu0 %v227
    %345 = vmatprep.subr.mxu0 %v232
    %346 = vmatpush1.msra.mxu0 %v231
    %347 = vmatprep.subr.mxu0 %v236
    %348 = vmatpush1.msra.mxu0 %v235
    %349 = vmatprep.subr.mxu0 %v240
    %350 = vmatpush1.msra.mxu0 %v239
    %351 = vmatprep.subr.mxu0 %v244
    %352 = vmatpush1.msra.mxu0 %v243
    %353 = vmatprep.subr.mxu0 %v248
    %354 = vmatpush1.msra.mxu0 %v247
    %355 = vmatprep.subr.mxu0 %v252
    %356 = vmatpush1.msra.mxu0 %v251
    %357 = vmatprep.subr.mxu0 %v256
    %358 = vmatpush1.msra.mxu0 %v255
    %359 = vmatprep.subr.mxu0 %v260
    %360 = vmatpush1.msra.mxu0 %v259
    %361 = vmatprep.subr.mxu0 %v264
    %362 = vmatpush1.msra.mxu0 %v263
    %363 = vmatprep.subr.mxu0 %v268
    %364 = vmatpush1.msra.mxu0 %v267
    %365 = vmatprep.subr.mxu0 %v272
    %366 = vmatpush1.msra.mxu0 %v271
    %367 = vmatprep.subr.mxu0 %v276
    %368 = vmatpush1.msra.mxu0 %v275
    %369 = vmatprep.subr.mxu0 %v280
    %370 = vmatpush1.msra.mxu0 %v279
    %371 = vmatprep.subr.mxu0 %v284
    %372 = vmatpush1.msra.mxu0 %v283
    %373 = vmatprep.mubr.f32.mxu0 %v128
    %374 = vmatmul.mubr.f32.gmra.mrb[0].mxu0 %v127
    %v375 = vpop.f32.mrb[0].mxu0
    %v376 = vadd.f32 %v292, %v375
    %v377 = vpop.f32.mrb[0].mxu0
    %v378 = vadd.f32 %v296, %v377
    %379 = vmatprep.mubr.f32.mxu0 %v130
    %380 = vmatmul.mubr.f32.gmra.mrb[0].mxu0 %v129
    %v381 = vpop.f32.mrb[0].mxu0
    %v382 = vadd.f32 %v292, %v381
    %v383 = vpop.f32.mrb[0].mxu0
    %v384 = vadd.f32 %v296, %v383
    %385 = vmatprep.mubr.f32.mxu0 %v132
    %386 = vmatmul.mubr.f32.gmra.mrb[0].mxu0 %v131
    %v387 = vpop.f32.mrb[0].mxu0
    %v388 = vadd.f32 %v292, %v387
    %v389 = vpop.f32.mrb[0].mxu0
    %v390 = vadd.f32 %v296, %v389
    %391 = vmatprep.mubr.f32.mxu0 %v134
    %392 = vmatmul.mubr.f32.gmra.mrb[0].mxu0 %v133
    %v393 = vpop.f32.mrb[0].mxu0
    %v394 = vadd.f32 %v292, %v393
    %v395 = vpop.f32.mrb[0].mxu0
    %v396 = vadd.f32 %v296, %v395
    %397 = vmatprep.mubr.f32.mxu0 %v136
    %398 = vmatmul.mubr.f32.gmra.mrb[0].mxu0 %v135
    %v399 = vpop.f32.mrb[0].mxu0
    %v400 = vadd.f32 %v292, %v399
    %v401 = vpop.f32.mrb[0].mxu0
    %v402 = vadd.f32 %v296, %v401
    %403 = vmatprep.mubr.f32.mxu0 %v138
    %404 = vmatmul.mubr.f32.gmra.mrb[0].mxu0 %v137
    %v405 = vpop.f32.mrb[0].mxu0
    %v406 = vadd.f32 %v292, %v405
    %v407 = vpop.f32.mrb[0].mxu0
    %v408 = vadd.f32 %v296, %v407
    %409 = vmatprep.mubr.f32.mxu0 %v140
    %410 = vmatmul.mubr.f32.gmra.mrb[0].mxu0 %v139
    %v411 = vpop.f32.mrb[0].mxu0
    %v412 = vadd.f32 %v292, %v411
    %v413 = vpop.f32.mrb[0].mxu0
    %v414 = vadd.f32 %v296, %v413
    %415 = vmatprep.mubr.f32.mxu0 %v142
    %416 = vmatmul.mubr.f32.gmra.mrb[0].mxu0 %v141
    %v417 = vpop.f32.mrb[0].mxu0
    %v418 = vadd.f32 %v292, %v417
    %v419 = vpop.f32.mrb[0].mxu0
    %v420 = vadd.f32 %v296, %v419
    %421 = vmatprep.mubr.f32.mxu0 %v144
    %422 = vmatmul.mubr.f32.gmra.mrb[0].mxu0 %v143
    %v423 = vpop.f32.mrb[0].mxu0
    %v424 = vadd.f32 %v292, %v423
    %v425 = vpop.f32.mrb[0].mxu0
    %v426 = vadd.f32 %v296, %v425
    %427 = vmatprep.mubr.f32.mxu0 %v146
    %428 = vmatmul.mubr.f32.gmra.mrb[0].mxu0 %v145
    %v429 = vpop.f32.mrb[0].mxu0
    %v430 = vadd.f32 %v292, %v429
    %v431 = vpop.f32.mrb[0].mxu0
    %v432 = vadd.f32 %v296, %v431
    %433 = vmatprep.mubr.f32.mxu0 %v148
    %434 = vmatmul.mubr.f32.gmra.mrb[0].mxu0 %v147
    %v435 = vpop.f32.mrb[0].mxu0
    %v436 = vadd.f32 %v292, %v435
    %v437 = vpop.f32.mrb[0].mxu0
    %v438 = vadd.f32 %v296, %v437
    %439 = vmatprep.mubr.f32.mxu0 %v150
    %440 = vmatmul.mubr.f32.gmra.mrb[0].mxu0 %v149
    %v441 = vpop.f32.mrb[0].mxu0
    %v442 = vadd.f32 %v292, %v441
    %v443 = vpop.f32.mrb[0].mxu0
    %v444 = vadd.f32 %v296, %v443
    %445 = vmatprep.mubr.f32.mxu0 %v152
    %446 = vmatmul.mubr.f32.gmra.mrb[0].mxu0 %v151
    %v447 = vpop.f32.mrb[0].mxu0
    %v448 = vadd.f32 %v292, %v447
    %v449 = vpop.f32.mrb[0].mxu0
    %v450 = vadd.f32 %v296, %v449
    %451 = vmatprep.mubr.f32.mxu0 %v154
    %452 = vmatmul.mubr.f32.gmra.mrb[0].mxu0 %v153
    %v453 = vpop.f32.mrb[0].mxu0
    %v454 = vadd.f32 %v292, %v453
    %v455 = vpop.f32.mrb[0].mxu0
    %v456 = vadd.f32 %v296, %v455
    %457 = vmatprep.mubr.f32.mxu0 %v156
    %458 = vmatmul.mubr.f32.gmra.mrb[0].mxu0 %v155
    %v459 = vpop.f32.mrb[0].mxu0
    %v460 = vadd.f32 %v292, %v459
    %v461 = vpop.f32.mrb[0].mxu0
    %v462 = vadd.f32 %v296, %v461
    %463 = vmatprep.mubr.f32.mxu0 %v158
    %464 = vmatmul.mubr.f32.gmra.mrb[0].mxu0 %v157
    %v465 = vpop.f32.mrb[0].mxu0
    %v466 = vadd.f32 %v292, %v465
    %v467 = vpop.f32.mrb[0].mxu0
    %v468 = vadd.f32 %v296, %v467
    %469 = vdwg.mxu0
    %470 = vmatprep.subr.mxu0 %v162
    %471 = vmatpush1.msra.mxu0 %v161
    %472 = vmatprep.subr.mxu0 %v166
    %473 = vmatpush1.msra.mxu0 %v165
    %474 = vmatprep.subr.mxu0 %v170
    %475 = vmatpush1.msra.mxu0 %v169
    %476 = vmatprep.subr.mxu0 %v174
    %477 = vmatpush1.msra.mxu0 %v173
    %478 = vmatprep.subr.mxu0 %v178
    %479 = vmatpush1.msra.mxu0 %v177
    %480 = vmatprep.subr.mxu0 %v182
    %481 = vmatpush1.msra.mxu0 %v181
    %482 = vmatprep.subr.mxu0 %v186
    %483 = vmatpush1.msra.mxu0 %v185
    %484 = vmatprep.subr.mxu0 %v190
    %485 = vmatpush1.msra.mxu0 %v189
    %486 = vmatprep.subr.mxu0 %v194
    %487 = vmatpush1.msra.mxu0 %v193
    %488 = vmatprep.subr.mxu0 %v198
    %489 = vmatpush1.msra.mxu0 %v197
    %490 = vmatprep.subr.mxu0 %v202
    %491 = vmatpush1.msra.mxu0 %v201
    %492 = vmatprep.subr.mxu0 %v206
    %493 = vmatpush1.msra.mxu0 %v205
    %494 = vmatprep.subr.mxu0 %v210
    %495 = vmatpush1.msra.mxu0 %v209
    %496 = vmatprep.subr.mxu0 %v214
    %497 = vmatpush1.msra.mxu0 %v213
    %498 = vmatprep.subr.mxu0 %v218
    %499 = vmatpush1.msra.mxu0 %v217
    %500 = vmatprep.subr.mxu0 %v222
    %501 = vmatpush1.msra.mxu0 %v221
    %502 = vmatprep.subr.mxu0 %v226
    %503 = vmatpush1.msra.mxu0 %v225
    %504 = vmatprep.subr.mxu0 %v230
    %505 = vmatpush1.msra.mxu0 %v229
    %506 = vmatprep.subr.mxu0 %v234
    %507 = vmatpush1.msra.mxu0 %v233
    %508 = vmatprep.subr.mxu0 %v238
    %509 = vmatpush1.msra.mxu0 %v237
    %510 = vmatprep.subr.mxu0 %v242
    %511 = vmatpush1.msra.mxu0 %v241
    %512 = vmatprep.subr.mxu0 %v246
    %513 = vmatpush1.msra.mxu0 %v245
    %514 = vmatprep.subr.mxu0 %v250
    %515 = vmatpush1.msra.mxu0 %v249
    %516 = vmatprep.subr.mxu0 %v254
    %517 = vmatpush1.msra.mxu0 %v253
    %518 = vmatprep.subr.mxu0 %v258
    %519 = vmatpush1.msra.mxu0 %v257
    %520 = vmatprep.subr.mxu0 %v262
    %521 = vmatpush1.msra.mxu0 %v261
    %522 = vmatprep.subr.mxu0 %v266
    %523 = vmatpush1.msra.mxu0 %v265
    %524 = vmatprep.subr.mxu0 %v270
    %525 = vmatpush1.msra.mxu0 %v269
    %526 = vmatprep.subr.mxu0 %v274
    %527 = vmatpush1.msra.mxu0 %v273
    %528 = vmatprep.subr.mxu0 %v278
    %529 = vmatpush1.msra.mxu0 %v277
    %530 = vmatprep.subr.mxu0 %v282
    %531 = vmatpush1.msra.mxu0 %v281
    %532 = vmatprep.subr.mxu0 %v286
    %533 = vmatpush1.msra.mxu0 %v285
    %534 = vmatprep.mubr.f32.mxu0 %v128
    %535 = vmatmul.mubr.f32.gmra.mrb[0].mxu0 %v127
    %v536 = vpop.f32.mrb[0].mxu0
    %v537 = vadd.f32 %v300, %v536
    %v538 = vpop.f32.mrb[0].mxu0
    %v539 = vadd.f32 %v304, %v538
    %540 = vmatprep.mubr.f32.mxu0 %v130
    %541 = vmatmul.mubr.f32.gmra.mrb[0].mxu0 %v129
    %v542 = vpop.f32.mrb[0].mxu0
    %v543 = vadd.f32 %v300, %v542
    %v544 = vpop.f32.mrb[0].mxu0
    %v545 = vadd.f32 %v304, %v544
    %546 = vmatprep.mubr.f32.mxu0 %v132
    %547 = vmatmul.mubr.f32.gmra.mrb[0].mxu0 %v131
    %v548 = vpop.f32.mrb[0].mxu0
    %v549 = vadd.f32 %v300, %v548
    %v550 = vpop.f32.mrb[0].mxu0
    %v551 = vadd.f32 %v304, %v550
    %552 = vmatprep.mubr.f32.mxu0 %v134
    %553 = vmatmul.mubr.f32.gmra.mrb[0].mxu0 %v133
    %v554 = vpop.f32.mrb[0].mxu0
    %v555 = vadd.f32 %v300, %v554
    %v556 = vpop.f32.mrb[0].mxu0
    %v557 = vadd.f32 %v304, %v556
    %558 = vmatprep.mubr.f32.mxu0 %v136
    %559 = vmatmul.mubr.f32.gmra.mrb[0].mxu0 %v135
    %v560 = vpop.f32.mrb[0].mxu0
    %v561 = vadd.f32 %v300, %v560
    %v562 = vpop.f32.mrb[0].mxu0
    %v563 = vadd.f32 %v304, %v562
    %564 = vmatprep.mubr.f32.mxu0 %v138
    %565 = vmatmul.mubr.f32.gmra.mrb[0].mxu0 %v137
    %v566 = vpop.f32.mrb[0].mxu0
    %v567 = vadd.f32 %v300, %v566
    %v568 = vpop.f32.mrb[0].mxu0
    %v569 = vadd.f32 %v304, %v568
    %570 = vmatprep.mubr.f32.mxu0 %v140
    %571 = vmatmul.mubr.f32.gmra.mrb[0].mxu0 %v139
    %v572 = vpop.f32.mrb[0].mxu0
    %v573 = vadd.f32 %v300, %v572
    %v574 = vpop.f32.mrb[0].mxu0
    %v575 = vadd.f32 %v304, %v574
    %576 = vmatprep.mubr.f32.mxu0 %v142
    %577 = vmatmul.mubr.f32.gmra.mrb[0].mxu0 %v141
    %v578 = vpop.f32.mrb[0].mxu0
    %v579 = vadd.f32 %v300, %v578
    %v580 = vpop.f32.mrb[0].mxu0
    %v581 = vadd.f32 %v304, %v580
    %582 = vmatprep.mubr.f32.mxu0 %v144
    %583 = vmatmul.mubr.f32.gmra.mrb[0].mxu0 %v143
    %v584 = vpop.f32.mrb[0].mxu0
    %v585 = vadd.f32 %v300, %v584
    %v586 = vpop.f32.mrb[0].mxu0
    %v587 = vadd.f32 %v304, %v586
    %588 = vmatprep.mubr.f32.mxu0 %v146
    %589 = vmatmul.mubr.f32.gmra.mrb[0].mxu0 %v145
    %v590 = vpop.f32.mrb[0].mxu0
    %v591 = vadd.f32 %v300, %v590
    %v592 = vpop.f32.mrb[0].mxu0
    %v593 = vadd.f32 %v304, %v592
    %594 = vmatprep.mubr.f32.mxu0 %v148
    %595 = vmatmul.mubr.f32.gmra.mrb[0].mxu0 %v147
    %v596 = vpop.f32.mrb[0].mxu0
    %v597 = vadd.f32 %v300, %v596
    %v598 = vpop.f32.mrb[0].mxu0
    %v599 = vadd.f32 %v304, %v598
    %600 = vmatprep.mubr.f32.mxu0 %v150
    %601 = vmatmul.mubr.f32.gmra.mrb[0].mxu0 %v149
    %v602 = vpop.f32.mrb[0].mxu0
    %v603 = vadd.f32 %v300, %v602
    %v604 = vpop.f32.mrb[0].mxu0
    %v605 = vadd.f32 %v304, %v604
    %606 = vmatprep.mubr.f32.mxu0 %v152
    %607 = vmatmul.mubr.f32.gmra.mrb[0].mxu0 %v151
    %v608 = vpop.f32.mrb[0].mxu0
    %v609 = vadd.f32 %v300, %v608
    %v610 = vpop.f32.mrb[0].mxu0
    %v611 = vadd.f32 %v304, %v610
    %612 = vmatprep.mubr.f32.mxu0 %v154
    %613 = vmatmul.mubr.f32.gmra.mrb[0].mxu0 %v153
    %v614 = vpop.f32.mrb[0].mxu0
    %v615 = vadd.f32 %v300, %v614
    %v616 = vpop.f32.mrb[0].mxu0
    %v617 = vadd.f32 %v304, %v616
    %618 = vmatprep.mubr.f32.mxu0 %v156
    %619 = vmatmul.mubr.f32.gmra.mrb[0].mxu0 %v155
    %v620 = vpop.f32.mrb[0].mxu0
    %v621 = vadd.f32 %v300, %v620
    %v622 = vpop.f32.mrb[0].mxu0
    %v623 = vadd.f32 %v304, %v622
    %624 = vmatprep.mubr.f32.mxu0 %v158
    %625 = vmatmul.mubr.f32.gmra.mrb[0].mxu0 %v157
    %v626 = vpop.f32.mrb[0].mxu0
    %v627 = vadd.f32 %v300, %v626
    %v628 = vpop.f32.mrb[0].mxu0
    %v629 = vadd.f32 %v304, %v628
    %630 = vdwg.mxu0
    %631 = vst [vmem:[#allocation3] sm:$0xff] %v376
    %632 = vst [vmem:[#allocation3 + $0x8] sm:$0xff] %v378
    %633 = vst [vmem:[#allocation3 + $0x10] sm:$0xff] %v537
    %634 = vst [vmem:[#allocation3 + $0x18] sm:$0xff] %v539
    %635 = vst [vmem:[#allocation3 + $0x20] sm:$0xff] %v382
    %636 = vst [vmem:[#allocation3 + $0x28] sm:$0xff] %v384
    %637 = vst [vmem:[#allocation3 + $0x30] sm:$0xff] %v543
    %638 = vst [vmem:[#allocation3 + $0x38] sm:$0xff] %v545
    %639 = vst [vmem:[#allocation3 + $0x40] sm:$0xff] %v388
    %640 = vst [vmem:[#allocation3 + $0x48] sm:$0xff] %v390
    %641 = vst [vmem:[#allocation3 + $0x50] sm:$0xff] %v549
    %642 = vst [vmem:[#allocation3 + $0x58] sm:$0xff] %v551
    %643 = vst [vmem:[#allocation3 + $0x60] sm:$0xff] %v394
    %644 = vst [vmem:[#allocation3 + $0x68] sm:$0xff] %v396
    %645 = vst [vmem:[#allocation3 + $0x70] sm:$0xff] %v555
    %646 = vst [vmem:[#allocation3 + $0x78] sm:$0xff] %v557
    %647 = vst [vmem:[#allocation3 + $0x80] sm:$0xff] %v400
    %648 = vst [vmem:[#allocation3 + $0x88] sm:$0xff] %v402
    %649 = vst [vmem:[#allocation3 + $0x90] sm:$0xff] %v561
    %650 = vst [vmem:[#allocation3 + $0x98] sm:$0xff] %v563
    %651 = vst [vmem:[#allocation3 + $0xa0] sm:$0xff] %v406
    %652 = vst [vmem:[#allocation3 + $0xa8] sm:$0xff] %v408
    %653 = vst [vmem:[#allocation3 + $0xb0] sm:$0xff] %v567
    %654 = vst [vmem:[#allocation3 + $0xb8] sm:$0xff] %v569
    %655 = vst [vmem:[#allocation3 + $0xc0] sm:$0xff] %v412
    %656 = vst [vmem:[#allocation3 + $0xc8] sm:$0xff] %v414
    %657 = vst [vmem:[#allocation3 + $0xd0] sm:$0xff] %v573
    %658 = vst [vmem:[#allocation3 + $0xd8] sm:$0xff] %v575
    %659 = vst [vmem:[#allocation3 + $0xe0] sm:$0xff] %v418
    %660 = vst [vmem:[#allocation3 + $0xe8] sm:$0xff] %v420
    %661 = vst [vmem:[#allocation3 + $0xf0] sm:$0xff] %v579
    %662 = vst [vmem:[#allocation3 + $0xf8] sm:$0xff] %v581
    %663 = vst [vmem:[#allocation3 + $0x100] sm:$0xff] %v424
    %664 = vst [vmem:[#allocation3 + $0x108] sm:$0xff] %v426
    %665 = vst [vmem:[#allocation3 + $0x110] sm:$0xff] %v585
    %666 = vst [vmem:[#allocation3 + $0x118] sm:$0xff] %v587
    %667 = vst [vmem:[#allocation3 + $0x120] sm:$0xff] %v430
    %668 = vst [vmem:[#allocation3 + $0x128] sm:$0xff] %v432
    %669 = vst [vmem:[#allocation3 + $0x130] sm:$0xff] %v591
    %670 = vst [vmem:[#allocation3 + $0x138] sm:$0xff] %v593
    %671 = vst [vmem:[#allocation3 + $0x140] sm:$0xff] %v436
    %672 = vst [vmem:[#allocation3 + $0x148] sm:$0xff] %v438
    %673 = vst [vmem:[#allocation3 + $0x150] sm:$0xff] %v597
    %674 = vst [vmem:[#allocation3 + $0x158] sm:$0xff] %v599
    %675 = vst [vmem:[#allocation3 + $0x160] sm:$0xff] %v442
    %676 = vst [vmem:[#allocation3 + $0x168] sm:$0xff] %v444
    %677 = vst [vmem:[#allocation3 + $0x170] sm:$0xff] %v603
    %678 = vst [vmem:[#allocation3 + $0x178] sm:$0xff] %v605
    %679 = vst [vmem:[#allocation3 + $0x180] sm:$0xff] %v448
    %680 = vst [vmem:[#allocation3 + $0x188] sm:$0xff] %v450
    %681 = vst [vmem:[#allocation3 + $0x190] sm:$0xff] %v609
    %682 = vst [vmem:[#allocation3 + $0x198] sm:$0xff] %v611
    %683 = vst [vmem:[#allocation3 + $0x1a0] sm:$0xff] %v454
    %684 = vst [vmem:[#allocation3 + $0x1a8] sm:$0xff] %v456
    %685 = vst [vmem:[#allocation3 + $0x1b0] sm:$0xff] %v615
    %686 = vst [vmem:[#allocation3 + $0x1b8] sm:$0xff] %v617
    %687 = vst [vmem:[#allocation3 + $0x1c0] sm:$0xff] %v460
    %688 = vst [vmem:[#allocation3 + $0x1c8] sm:$0xff] %v462
    %689 = vst [vmem:[#allocation3 + $0x1d0] sm:$0xff] %v621
    %690 = vst [vmem:[#allocation3 + $0x1d8] sm:$0xff] %v623
    %691 = vst [vmem:[#allocation3 + $0x1e0] sm:$0xff] %v466
    %692 = vst [vmem:[#allocation3 + $0x1e8] sm:$0xff] %v468
    %693 = vst [vmem:[#allocation3 + $0x1f0] sm:$0xff] %v627
    %694 = vst [vmem:[#allocation3 + $0x1f8] sm:$0xff] %v629
    %v695 = vld [vmem:[#allocation3] sm:$0xff]
    %v696 = vld [vmem:[#allocation3 + $0x20] sm:$0xff]
    %v697 = vld [vmem:[#allocation3 + $0x40] sm:$0xff]
    %v698 = vld [vmem:[#allocation3 + $0x60] sm:$0xff]
    %v699 = vld [vmem:[#allocation3 + $0x80] sm:$0xff]
    %v700 = vld [vmem:[#allocation3 + $0xa0] sm:$0xff]
    %v701 = vld [vmem:[#allocation3 + $0xc0] sm:$0xff]
    %v702 = vld [vmem:[#allocation3 + $0xe0] sm:$0xff]
    %v703 = vld [vmem:[#allocation3 + $0x100] sm:$0xff]
    %v704 = vld [vmem:[#allocation3 + $0x120] sm:$0xff]
    %v705 = vld [vmem:[#allocation3 + $0x140] sm:$0xff]
    %v706 = vld [vmem:[#allocation3 + $0x160] sm:$0xff]
    %v707 = vld [vmem:[#allocation3 + $0x180] sm:$0xff]
    %v708 = vld [vmem:[#allocation3 + $0x1a0] sm:$0xff]
    %v709 = vld [vmem:[#allocation3 + $0x1c0] sm:$0xff]
    %v710 = vld [vmem:[#allocation3 + $0x1e0] sm:$0xff]
    %v711 = vmul.f32 %v695, 0.5
    %v712 = vmul.f32 %v696, 0.5
    %v713 = vmul.f32 %v697, 0.5
    %v714 = vmul.f32 %v698, 0.5
    %v715 = vmul.f32 %v699, 0.5
    %v716 = vmul.f32 %v700, 0.5
    %v717 = vmul.f32 %v701, 0.5
    %v718 = vmul.f32 %v702, 0.5
    %v719 = vmul.f32 %v703, 0.5
    %v720 = vmul.f32 %v704, 0.5
    %v721 = vmul.f32 %v705, 0.5
    %v722 = vmul.f32 %v706, 0.5
    %v723 = vmul.f32 %v707, 0.5
    %v724 = vmul.f32 %v708, 0.5
    %v725 = vmul.f32 %v709, 0.5
    %v726 = vmul.f32 %v710, 0.5
    %v727 = vtanh.pop %v711
    %v728 = vtanh.pop %v712
    %v729 = vtanh.pop %v713
    %v730 = vtanh.pop %v714
    %v731 = vtanh.pop %v715
    %v732 = vtanh.pop %v716
    %v733 = vtanh.pop %v717
    %v734 = vtanh.pop %v718
    %v735 = vtanh.pop %v719
    %v736 = vtanh.pop %v720
    %v737 = vtanh.pop %v721
    %v738 = vtanh.pop %v722
    %v739 = vtanh.pop %v723
    %v740 = vtanh.pop %v724
    %v741 = vtanh.pop %v725
    %v742 = vtanh.pop %v726
    %v743 = vmul.f32 %v727, 0.5
    %v744 = vmul.f32 %v728, 0.5
    %v745 = vmul.f32 %v729, 0.5
    %v746 = vmul.f32 %v730, 0.5
    %v747 = vmul.f32 %v731, 0.5
    %v748 = vmul.f32 %v732, 0.5
    %v749 = vmul.f32 %v733, 0.5
    %v750 = vmul.f32 %v734, 0.5
    %v751 = vmul.f32 %v735, 0.5
    %v752 = vmul.f32 %v736, 0.5
    %v753 = vmul.f32 %v737, 0.5
    %v754 = vmul.f32 %v738, 0.5
    %v755 = vmul.f32 %v739, 0.5
    %v756 = vmul.f32 %v740, 0.5
    %v757 = vmul.f32 %v741, 0.5
    %v758 = vmul.f32 %v742, 0.5
    %v759 = vadd.f32 %v743, 0.5
    %v760 = vadd.f32 %v744, 0.5
    %v761 = vadd.f32 %v745, 0.5
    %v762 = vadd.f32 %v746, 0.5
    %v763 = vadd.f32 %v747, 0.5
    %v764 = vadd.f32 %v748, 0.5
    %v765 = vadd.f32 %v749, 0.5
    %v766 = vadd.f32 %v750, 0.5
    %v767 = vadd.f32 %v751, 0.5
    %v768 = vadd.f32 %v752, 0.5
    %v769 = vadd.f32 %v753, 0.5
    %v770 = vadd.f32 %v754, 0.5
    %v771 = vadd.f32 %v755, 0.5
    %v772 = vadd.f32 %v756, 0.5
    %v773 = vadd.f32 %v757, 0.5
    %v774 = vadd.f32 %v758, 0.5
    %v775 = vld [vmem:[#allocation3 + $0x8] sm:$0xff]
    %v776 = vld [vmem:[#allocation3 + $0x28] sm:$0xff]
    %v777 = vld [vmem:[#allocation3 + $0x48] sm:$0xff]
    %v778 = vld [vmem:[#allocation3 + $0x68] sm:$0xff]
    %v779 = vld [vmem:[#allocation3 + $0x88] sm:$0xff]
    %v780 = vld [vmem:[#allocation3 + $0xa8] sm:$0xff]
    %v781 = vld [vmem:[#allocation3 + $0xc8] sm:$0xff]
    %v782 = vld [vmem:[#allocation3 + $0xe8] sm:$0xff]
    %v783 = vld [vmem:[#allocation3 + $0x108] sm:$0xff]
    %v784 = vld [vmem:[#allocation3 + $0x128] sm:$0xff]
    %v785 = vld [vmem:[#allocation3 + $0x148] sm:$0xff]
    %v786 = vld [vmem:[#allocation3 + $0x168] sm:$0xff]
    %v787 = vld [vmem:[#allocation3 + $0x188] sm:$0xff]
    %v788 = vld [vmem:[#allocation3 + $0x1a8] sm:$0xff]
    %v789 = vld [vmem:[#allocation3 + $0x1c8] sm:$0xff]
    %v790 = vld [vmem:[#allocation3 + $0x1e8] sm:$0xff]
    %v791 = vmul.f32 %v775, 0.5
    %v792 = vmul.f32 %v776, 0.5
    %v793 = vmul.f32 %v777, 0.5
    %v794 = vmul.f32 %v778, 0.5
    %v795 = vmul.f32 %v779, 0.5
    %v796 = vmul.f32 %v780, 0.5
    %v797 = vmul.f32 %v781, 0.5
    %v798 = vmul.f32 %v782, 0.5
    %v799 = vmul.f32 %v783, 0.5
    %v800 = vmul.f32 %v784, 0.5
    %v801 = vmul.f32 %v785, 0.5
    %v802 = vmul.f32 %v786, 0.5
    %v803 = vmul.f32 %v787, 0.5
    %v804 = vmul.f32 %v788, 0.5
    %v805 = vmul.f32 %v789, 0.5
    %v806 = vmul.f32 %v790, 0.5
    %v807 = vtanh.pop %v791
    %v808 = vtanh.pop %v792
    %v809 = vtanh.pop %v793
    %v810 = vtanh.pop %v794
    %v811 = vtanh.pop %v795
    %v812 = vtanh.pop %v796
    %v813 = vtanh.pop %v797
    %v814 = vtanh.pop %v798
    %v815 = vtanh.pop %v799
    %v816 = vtanh.pop %v800
    %v817 = vtanh.pop %v801
    %v818 = vtanh.pop %v802
    %v819 = vtanh.pop %v803
    %v820 = vtanh.pop %v804
    %v821 = vtanh.pop %v805
    %v822 = vtanh.pop %v806
    %v823 = vmul.f32 %v807, 0.5
    %v824 = vmul.f32 %v808, 0.5
    %v825 = vmul.f32 %v809, 0.5
    %v826 = vmul.f32 %v810, 0.5
    %v827 = vmul.f32 %v811, 0.5
    %v828 = vmul.f32 %v812, 0.5
    %v829 = vmul.f32 %v813, 0.5
    %v830 = vmul.f32 %v814, 0.5
    %v831 = vmul.f32 %v815, 0.5
    %v832 = vmul.f32 %v816, 0.5
    %v833 = vmul.f32 %v817, 0.5
    %v834 = vmul.f32 %v818, 0.5
    %v835 = vmul.f32 %v819, 0.5
    %v836 = vmul.f32 %v820, 0.5
    %v837 = vmul.f32 %v821, 0.5
    %v838 = vmul.f32 %v822, 0.5
    %v839 = vadd.f32 %v823, 0.5
    %v840 = vadd.f32 %v824, 0.5
    %v841 = vadd.f32 %v825, 0.5
    %v842 = vadd.f32 %v826, 0.5
    %v843 = vadd.f32 %v827, 0.5
    %v844 = vadd.f32 %v828, 0.5
    %v845 = vadd.f32 %v829, 0.5
    %v846 = vadd.f32 %v830, 0.5
    %v847 = vadd.f32 %v831, 0.5
    %v848 = vadd.f32 %v832, 0.5
    %v849 = vadd.f32 %v833, 0.5
    %v850 = vadd.f32 %v834, 0.5
    %v851 = vadd.f32 %v835, 0.5
    %v852 = vadd.f32 %v836, 0.5
    %v853 = vadd.f32 %v837, 0.5
    %v854 = vadd.f32 %v838, 0.5
    %v855 = vld [vmem:[#allocation3 + $0x10] sm:$0xff]
    %v856 = vld [vmem:[#allocation3 + $0x30] sm:$0xff]
    %v857 = vld [vmem:[#allocation3 + $0x50] sm:$0xff]
    %v858 = vld [vmem:[#allocation3 + $0x70] sm:$0xff]
    %v859 = vld [vmem:[#allocation3 + $0x90] sm:$0xff]
    %v860 = vld [vmem:[#allocation3 + $0xb0] sm:$0xff]
    %v861 = vld [vmem:[#allocation3 + $0xd0] sm:$0xff]
    %v862 = vld [vmem:[#allocation3 + $0xf0] sm:$0xff]
    %v863 = vld [vmem:[#allocation3 + $0x110] sm:$0xff]
    %v864 = vld [vmem:[#allocation3 + $0x130] sm:$0xff]
    %v865 = vld [vmem:[#allocation3 + $0x150] sm:$0xff]
    %v866 = vld [vmem:[#allocation3 + $0x170] sm:$0xff]
    %v867 = vld [vmem:[#allocation3 + $0x190] sm:$0xff]
    %v868 = vld [vmem:[#allocation3 + $0x1b0] sm:$0xff]
    %v869 = vld [vmem:[#allocation3 + $0x1d0] sm:$0xff]
    %v870 = vld [vmem:[#allocation3 + $0x1f0] sm:$0xff]
    %v871 = vtanh.pop %v855
    %v872 = vtanh.pop %v856
    %v873 = vtanh.pop %v857
    %v874 = vtanh.pop %v858
    %v875 = vtanh.pop %v859
    %v876 = vtanh.pop %v860
    %v877 = vtanh.pop %v861
    %v878 = vtanh.pop %v862
    %v879 = vtanh.pop %v863
    %v880 = vtanh.pop %v864
    %v881 = vtanh.pop %v865
    %v882 = vtanh.pop %v866
    %v883 = vtanh.pop %v867
    %v884 = vtanh.pop %v868
    %v885 = vtanh.pop %v869
    %v886 = vtanh.pop %v870
    %v887 = vld [vmem:[#allocation3 + $0x18] sm:$0xff]
    %v888 = vld [vmem:[#allocation3 + $0x38] sm:$0xff]
    %v889 = vld [vmem:[#allocation3 + $0x58] sm:$0xff]
    %v890 = vld [vmem:[#allocation3 + $0x78] sm:$0xff]
    %v891 = vld [vmem:[#allocation3 + $0x98] sm:$0xff]
    %v892 = vld [vmem:[#allocation3 + $0xb8] sm:$0xff]
    %v893 = vld [vmem:[#allocation3 + $0xd8] sm:$0xff]
    %v894 = vld [vmem:[#allocation3 + $0xf8] sm:$0xff]
    %v895 = vld [vmem:[#allocation3 + $0x118] sm:$0xff]
    %v896 = vld [vmem:[#allocation3 + $0x138] sm:$0xff]
    %v897 = vld [vmem:[#allocation3 + $0x158] sm:$0xff]
    %v898 = vld [vmem:[#allocation3 + $0x178] sm:$0xff]
    %v899 = vld [vmem:[#allocation3 + $0x198] sm:$0xff]
    %v900 = vld [vmem:[#allocation3 + $0x1b8] sm:$0xff]
    %v901 = vld [vmem:[#allocation3 + $0x1d8] sm:$0xff]
    %v902 = vld [vmem:[#allocation3 + $0x1f8] sm:$0xff]
    %v903 = vmul.f32 %v887, 0.5
    %v904 = vmul.f32 %v888, 0.5
    %v905 = vmul.f32 %v889, 0.5
    %v906 = vmul.f32 %v890, 0.5
    %v907 = vmul.f32 %v891, 0.5
    %v908 = vmul.f32 %v892, 0.5
    %v909 = vmul.f32 %v893, 0.5
    %v910 = vmul.f32 %v894, 0.5
    %v911 = vmul.f32 %v895, 0.5
    %v912 = vmul.f32 %v896, 0.5
    %v913 = vmul.f32 %v897, 0.5
    %v914 = vmul.f32 %v898, 0.5
    %v915 = vmul.f32 %v899, 0.5
    %v916 = vmul.f32 %v900, 0.5
    %v917 = vmul.f32 %v901, 0.5
    %v918 = vmul.f32 %v902, 0.5
    %v919 = vtanh.pop %v903
    %v920 = vtanh.pop %v904
    %v921 = vtanh.pop %v905
    %v922 = vtanh.pop %v906
    %v923 = vtanh.pop %v907
    %v924 = vtanh.pop %v908
    %v925 = vtanh.pop %v909
    %v926 = vtanh.pop %v910
    %v927 = vtanh.pop %v911
    %v928 = vtanh.pop %v912
    %v929 = vtanh.pop %v913
    %v930 = vtanh.pop %v914
    %v931 = vtanh.pop %v915
    %v932 = vtanh.pop %v916
    %v933 = vtanh.pop %v917
    %v934 = vtanh.pop %v918
    %v935 = vmul.f32 %v919, 0.5
    %v936 = vmul.f32 %v920, 0.5
    %v937 = vmul.f32 %v921, 0.5
    %v938 = vmul.f32 %v922, 0.5
    %v939 = vmul.f32 %v923, 0.5
    %v940 = vmul.f32 %v924, 0.5
    %v941 = vmul.f32 %v925, 0.5
    %v942 = vmul.f32 %v926, 0.5
    %v943 = vmul.f32 %v927, 0.5
    %v944 = vmul.f32 %v928, 0.5
    %v945 = vmul.f32 %v929, 0.5
    %v946 = vmul.f32 %v930, 0.5
    %v947 = vmul.f32 %v931, 0.5
    %v948 = vmul.f32 %v932, 0.5
    %v949 = vmul.f32 %v933, 0.5
    %v950 = vmul.f32 %v934, 0.5
    %v951 = vadd.f32 %v935, 0.5
    %v952 = vadd.f32 %v936, 0.5
    %v953 = vadd.f32 %v937, 0.5
    %v954 = vadd.f32 %v938, 0.5
    %v955 = vadd.f32 %v939, 0.5
    %v956 = vadd.f32 %v940, 0.5
    %v957 = vadd.f32 %v941, 0.5
    %v958 = vadd.f32 %v942, 0.5
    %v959 = vadd.f32 %v943, 0.5
    %v960 = vadd.f32 %v944, 0.5
    %v961 = vadd.f32 %v945, 0.5
    %v962 = vadd.f32 %v946, 0.5
    %v963 = vadd.f32 %v947, 0.5
    %v964 = vadd.f32 %v948, 0.5
    %v965 = vadd.f32 %v949, 0.5
    %v966 = vadd.f32 %v950, 0.5
    %v967 = vld [vmem:[#allocation4] sm:$0xff]
    %v968 = vld [vmem:[#allocation4 + $0x8] sm:$0xff]
    %v969 = vld [vmem:[#allocation4 + $0x10] sm:$0xff]
    %v970 = vld [vmem:[#allocation4 + $0x18] sm:$0xff]
    %v971 = vld [vmem:[#allocation4 + $0x20] sm:$0xff]
    %v972 = vld [vmem:[#allocation4 + $0x28] sm:$0xff]
    %v973 = vld [vmem:[#allocation4 + $0x30] sm:$0xff]
    %v974 = vld [vmem:[#allocation4 + $0x38] sm:$0xff]
    %v975 = vld [vmem:[#allocation4 + $0x40] sm:$0xff]
    %v976 = vld [vmem:[#allocation4 + $0x48] sm:$0xff]
    %v977 = vld [vmem:[#allocation4 + $0x50] sm:$0xff]
    %v978 = vld [vmem:[#allocation4 + $0x58] sm:$0xff]
    %v979 = vld [vmem:[#allocation4 + $0x60] sm:$0xff]
    %v980 = vld [vmem:[#allocation4 + $0x68] sm:$0xff]
    %v981 = vld [vmem:[#allocation4 + $0x70] sm:$0xff]
    %v982 = vld [vmem:[#allocation4 + $0x78] sm:$0xff]
    %v983 = vmul.f32 %v839, %v967
    %v984 = vmul.f32 %v840, %v968
    %v985 = vmul.f32 %v841, %v969
    %v986 = vmul.f32 %v842, %v970
    %v987 = vmul.f32 %v843, %v971
    %v988 = vmul.f32 %v844, %v972
    %v989 = vmul.f32 %v845, %v973
    %v990 = vmul.f32 %v846, %v974
    %v991 = vmul.f32 %v847, %v975
    %v992 = vmul.f32 %v848, %v976
    %v993 = vmul.f32 %v849, %v977
    %v994 = vmul.f32 %v850, %v978
    %v995 = vmul.f32 %v851, %v979
    %v996 = vmul.f32 %v852, %v980
    %v997 = vmul.f32 %v853, %v981
    %v998 = vmul.f32 %v854, %v982
    %v999 = vmul.f32 %v759, %v871
    %v1000 = vmul.f32 %v760, %v872
    %v1001 = vmul.f32 %v761, %v873
    %v1002 = vmul.f32 %v762, %v874
    %v1003 = vmul.f32 %v763, %v875
    %v1004 = vmul.f32 %v764, %v876
    %v1005 = vmul.f32 %v765, %v877
    %v1006 = vmul.f32 %v766, %v878
    %v1007 = vmul.f32 %v767, %v879
    %v1008 = vmul.f32 %v768, %v880
    %v1009 = vmul.f32 %v769, %v881
    %v1010 = vmul.f32 %v770, %v882
    %v1011 = vmul.f32 %v771, %v883
    %v1012 = vmul.f32 %v772, %v884
    %v1013 = vmul.f32 %v773, %v885
    %v1014 = vmul.f32 %v774, %v886
    %v1015 = vadd.f32 %v983, %v999
    %v1016 = vadd.f32 %v984, %v1000
    %v1017 = vadd.f32 %v985, %v1001
    %v1018 = vadd.f32 %v986, %v1002
    %v1019 = vadd.f32 %v987, %v1003
    %v1020 = vadd.f32 %v988, %v1004
    %v1021 = vadd.f32 %v989, %v1005
    %v1022 = vadd.f32 %v990, %v1006
    %v1023 = vadd.f32 %v991, %v1007
    %v1024 = vadd.f32 %v992, %v1008
    %v1025 = vadd.f32 %v993, %v1009
    %v1026 = vadd.f32 %v994, %v1010
    %v1027 = vadd.f32 %v995, %v1011
    %v1028 = vadd.f32 %v996, %v1012
    %v1029 = vadd.f32 %v997, %v1013
    %v1030 = vadd.f32 %v998, %v1014
    %v1031 = vtanh.pop %v1015
    %v1032 = vtanh.pop %v1016
    %v1033 = vtanh.pop %v1017
    %v1034 = vtanh.pop %v1018
    %v1035 = vtanh.pop %v1019
    %v1036 = vtanh.pop %v1020
    %v1037 = vtanh.pop %v1021
    %v1038 = vtanh.pop %v1022
    %v1039 = vtanh.pop %v1023
    %v1040 = vtanh.pop %v1024
    %v1041 = vtanh.pop %v1025
    %v1042 = vtanh.pop %v1026
    %v1043 = vtanh.pop %v1027
    %v1044 = vtanh.pop %v1028
    %v1045 = vtanh.pop %v1029
    %v1046 = vtanh.pop %v1030
    %v1047 = vmul.f32 %v951, %v1031
    %v1048 = vmul.f32 %v952, %v1032
    %v1049 = vmul.f32 %v953, %v1033
    %v1050 = vmul.f32 %v954, %v1034
    %v1051 = vmul.f32 %v955, %v1035
    %v1052 = vmul.f32 %v956, %v1036
    %v1053 = vmul.f32 %v957, %v1037
    %v1054 = vmul.f32 %v958, %v1038
    %v1055 = vmul.f32 %v959, %v1039
    %v1056 = vmul.f32 %v960, %v1040
    %v1057 = vmul.f32 %v961, %v1041
    %v1058 = vmul.f32 %v962, %v1042
    %v1059 = vmul.f32 %v963, %v1043
    %v1060 = vmul.f32 %v964, %v1044
    %v1061 = vmul.f32 %v965, %v1045
    %v1062 = vmul.f32 %v966, %v1046
    %1063 = vst [vmem:[#allocation11] sm:$0xff] %v1015
    %1064 = vst [vmem:[#allocation11 + $0x8] sm:$0xff] %v1016
    %1065 = vst [vmem:[#allocation11 + $0x10] sm:$0xff] %v1017
    %1066 = vst [vmem:[#allocation11 + $0x18] sm:$0xff] %v1018
    %1067 = vst [vmem:[#allocation11 + $0x20] sm:$0xff] %v1019
    %1068 = vst [vmem:[#allocation11 + $0x28] sm:$0xff] %v1020
    %1069 = vst [vmem:[#allocation11 + $0x30] sm:$0xff] %v1021
    %1070 = vst [vmem:[#allocation11 + $0x38] sm:$0xff] %v1022
    %1071 = vst [vmem:[#allocation11 + $0x40] sm:$0xff] %v1023
    %1072 = vst [vmem:[#allocation11 + $0x48] sm:$0xff] %v1024
    %1073 = vst [vmem:[#allocation11 + $0x50] sm:$0xff] %v1025
    %1074 = vst [vmem:[#allocation11 + $0x58] sm:$0xff] %v1026
    %1075 = vst [vmem:[#allocation11 + $0x60] sm:$0xff] %v1027
    %1076 = vst [vmem:[#allocation11 + $0x68] sm:$0xff] %v1028
    %1077 = vst [vmem:[#allocation11 + $0x70] sm:$0xff] %v1029
    %1078 = vst [vmem:[#allocation11 + $0x78] sm:$0xff] %v1030
    %1079 = vst [vmem:[#allocation10] sm:$0xff] %v1047
    %1080 = vst [vmem:[#allocation10 + $0x8] sm:$0xff] %v1048
    %1081 = vst [vmem:[#allocation10 + $0x10] sm:$0xff] %v1049
    %1082 = vst [vmem:[#allocation10 + $0x18] sm:$0xff] %v1050
    %1083 = vst [vmem:[#allocation10 + $0x20] sm:$0xff] %v1051
    %1084 = vst [vmem:[#allocation10 + $0x28] sm:$0xff] %v1052
    %1085 = vst [vmem:[#allocation10 + $0x30] sm:$0xff] %v1053
    %1086 = vst [vmem:[#allocation10 + $0x38] sm:$0xff] %v1054
    %1087 = vst [vmem:[#allocation10 + $0x40] sm:$0xff] %v1055
    %1088 = vst [vmem:[#allocation10 + $0x48] sm:$0xff] %v1056
    %1089 = vst [vmem:[#allocation10 + $0x50] sm:$0xff] %v1057
    %1090 = vst [vmem:[#allocation10 + $0x58] sm:$0xff] %v1058
    %1091 = vst [vmem:[#allocation10 + $0x60] sm:$0xff] %v1059
    %1092 = vst [vmem:[#allocation10 + $0x68] sm:$0xff] %v1060
    %1093 = vst [vmem:[#allocation10 + $0x70] sm:$0xff] %v1061
    %1094 = vst [vmem:[#allocation10 + $0x78] sm:$0xff] %v1062
    // Predicated region
    $region34: #{tpu_custom_call.1} parent=1 // pred_check
      _
    $region35: #{tpu_custom_call.1} parent=1 // pred_check_branch
      %1096 = sbr.rel (0) target = $region37
    $region36: #{tpu_custom_call.1} parent=1 // pred_region
      %s1098 = ssub.s32 2048, 2048
      %1099 = vsyncadd [#allocation6], %s1098
      %s1100 = sshll.u32 [#allocation10], 4
      %s1101 = int_to_ptr.vmem [resolvable:$true] %s1100
      %1106 = dma.vmem_to_hbm [thread:$0]  %s1101, 2048, %s5, [#allocation6], 128, 128, 8
    $region37: #{tpu_custom_call.1} parent=1 // pred_fallthru
      _
    // Predicated region
    $region38: #{tpu_custom_call.1} parent=1 // pred_check
      _
    $region39: #{tpu_custom_call.1} parent=1 // pred_check_branch
      %1108 = sbr.rel (0) target = $region41
    $region40: #{tpu_custom_call.1} parent=1 // pred_region
      %s1110 = ssub.s32 2048, 2048
      %1111 = vsyncadd [#allocation12], %s1110
      %s1112 = sshll.u32 [#allocation11], 4
      %s1113 = int_to_ptr.vmem [resolvable:$true] %s1112
      %1118 = dma.vmem_to_hbm [thread:$0]  %s1113, 2048, %s6, [#allocation12], 128, 128, 8
    $region41: #{tpu_custom_call.1} parent=1 // pred_fallthru
      _
    // Predicated region
    $region42: #{tpu_custom_call.1} parent=1 // pred_check
      _
    $region43: #{tpu_custom_call.1} parent=1 // pred_check_branch
      %1120 = sbr.rel (0) target = $region45
    $region44: #{tpu_custom_call.1} parent=1 // pred_region
      %1121 = dma.done [#allocation6], 2048
    $region45: #{tpu_custom_call.1} parent=1 // pred_fallthru
      _
    // Predicated region
    $region46: #{tpu_custom_call.1} parent=1 // pred_check
      _
    $region47: #{tpu_custom_call.1} parent=1 // pred_check_branch
      %1123 = sbr.rel (0) target = $region49
    $region48: #{tpu_custom_call.1} parent=1 // pred_region
      %1124 = dma.done [#allocation12], 2048
    $region49: #{tpu_custom_call.1} parent=1 // pred_fallthru
      _
    %1125 = vsyncpa [#allocation5], 1
    %1126 = vsyncpa [#allocation8], 1
    %1127 = vsyncpa [#allocation6], 1
    %1128 = vsyncpa [#allocation12], 1

</llo_original>
